<compile_context>
chip_gen: v7x
topology: tpu7x:2x2x1
jax: 0.10.0
libtpu: 0.0.40
codegen_flags: <defaults>
</compile_context>

<pallas_src>
import functools
import math

import jax
import jax.numpy as jnp
from jax.experimental import pallas as pl
from jax.experimental.pallas import tpu as pltpu


_LANE = 128
_SUBLANE = 8


def _round_up(x, m):
    return (x + m - 1) // m * m


def _pad2d(a, rows, cols):
    return jnp.pad(a, ((0, rows - a.shape[0]), (0, cols - a.shape[1])))


@functools.lru_cache(maxsize=None)
def _vmem_limits():
    """(vmem_limit_bytes, working-set budget) sized for this TPU generation.

    ~96 MiB limit on v5e/v6e (128 MiB physical VMEM), ~48 MiB on v7x (64 MiB/TC).
    """
    cap = 64 * 1024 * 1024
    try:
        cap = int(pltpu.get_tpu_info().vmem_capacity_bytes)
    except Exception:
        pass
    limit = min(cap * 3 // 4, 112 * 1024 * 1024)
    budget = limit * 5 // 6
    return limit, budget


def _choose_tm(m, per_row_bytes, resident_bytes, budget):
    """Largest row tile whose working set fits `budget`.

    Callers pass 2x bytes for every pipelined block (Pallas double-buffers all
    input blocks, including constant-index-map 'resident' weights) plus in-kernel
    f32 intermediates.  Once there is enough work for both v7x TensorCores the
    row grid keeps >= 2 steps, but a matmul tile is never shrunk below 256 rows
    just to split.
    """
    m8 = _round_up(max(m, 1), _SUBLANE)
    cap = min(1024, m8)
    if m8 >= 512:
        cap = min(cap, max(_round_up((m8 + 1) // 2, _SUBLANE), 256))
    for tm in (1024, 512, 256, 128, 64, 32, 16, 8):
        if tm <= cap and resident_bytes + tm * per_row_bytes <= budget:
            return tm
    return _SUBLANE


# ----------------------------- kernels --------------------------------------


def _masked_layernorm(v, gamma, beta, h_true, eps):
    """LayerNorm over the true hidden count; padded lanes stay exactly zero."""
    hp = v.shape[-1]
    if hp == h_true:
        mean = jnp.mean(v, axis=-1, keepdims=True)
        c = v - mean
        var = jnp.mean(c * c, axis=-1, keepdims=True)
    else:
        lane = jax.lax.broadcasted_iota(jnp.int32, v.shape, v.ndim - 1)
        valid = lane < h_true
        inv_h = 1.0 / h_true
        vm = jnp.where(valid, v, 0.0)
        mean = jnp.sum(vm, axis=-1, keepdims=True) * inv_h
        c = jnp.where(valid, v - mean, 0.0)
        var = jnp.sum(c * c, axis=-1, keepdims=True) * inv_h
    return c * jax.lax.rsqrt(var + eps) * gamma + beta


def qkv_linear_kernel(x_ref, w_ref, b_ref, o_ref):
    y = jnp.dot(x_ref[...], w_ref[...], preferred_element_type=jnp.float32)
    o_ref[...] = (y + b_ref[...]).astype(o_ref.dtype)


def attn_kernel(qkv_ref, mask_ref, o_ref, *, n_heads, head_dim, hp, inv_scale):
    """All heads of one batch element per grid step.

    qkv_ref: [1, S, 3*Hp]  (Q | K | V sections, each Hp wide, heads packed at
                            offsets h*head_dim inside the first H columns)
    mask_ref: [1, 1, S]     1.0 = keep key, 0.0 = padded key
    o_ref:   [1, S, Hp]     context in [B*S, Hp]-compatible row layout
    """
    qkv = qkv_ref[0]                                   # [S, 3*Hp]
    keep = mask_ref[0] >= 0.5                          # [1, S]
    s = qkv.shape[0]
    h_true = n_heads * head_dim
    # TODO(synk): for long sequences on v7x (S*S f32 > VMEM) switch this to a
    # KV-tiled online-softmax (flash) layout with m/l/acc scratch + pl.when.
    for h in range(n_heads):
        lo = h * head_dim
        q = qkv[:, lo:lo + head_dim]
        k = qkv[:, hp + lo:hp + lo + head_dim]
        v = qkv[:, 2 * hp + lo:2 * hp + lo + head_dim]
        energy = jax.lax.dot_general(
            q, k, (((1,), (1,)), ((), ())),
            preferred_element_type=jnp.float32) * inv_scale        # [S, S] f32
        energy = jnp.where(keep, energy, -1e10)
        e_max = jnp.max(energy, axis=-1, keepdims=True)
        p = jnp.exp(energy - e_max)
        denom = jnp.sum(p, axis=-1, keepdims=True)
        attn = p * pl.reciprocal(denom, approx=True)
        # TODO(synk): eval-mode dropout on the attention weights is identity.
        ctx_h = jnp.dot(attn.astype(v.dtype), v,
                        preferred_element_type=jnp.float32)
        o_ref[0, :, lo:lo + head_dim] = ctx_h.astype(o_ref.dtype)
    if hp > h_true:
        o_ref[0, :, h_true:] = jnp.zeros((s, hp - h_true), o_ref.dtype)


def oproj_add_ln_kernel(ctx_ref, res_ref, wo_ref, bo_ref, g_ref, bln_ref,
                        o_ref, *, eps, h_true):
    """LayerNorm(residual + (ctx @ Wo + bo)) fused in one row tile."""
    y = jnp.dot(ctx_ref[...], wo_ref[...],
                preferred_element_type=jnp.float32) + bo_ref[...]
    v = y + res_ref[...].astype(jnp.float32)
    o_ref[...] = _masked_layernorm(v, g_ref[...], bln_ref[...],
                                   h_true, eps).astype(o_ref.dtype)


def ffn_add_ln_kernel(x_ref, w1_ref, b1_ref, w2_ref, b2_ref, g_ref, bln_ref,
                      o_ref, *, eps, h_true):
    """LayerNorm(x + relu(x @ W1 + b1) @ W2 + b2) fused in one row tile."""
    x = x_ref[...]
    h1 = jnp.dot(x, w1_ref[...], preferred_element_type=jnp.float32) + b1_ref[...]
    # ReLU; feed the second MXU matmul at the activation dtype (bf16 MXU path
    # when the model runs in bf16 -- identity for the f32 toy config).
    h1 = jnp.maximum(h1, 0.0).astype(x.dtype)
    # TODO(synk): training-mode dropout would build a mask here with
    # pltpu.prng_seed / pltpu.prng_random_bits; eval mode is identity.
    y = jnp.dot(h1, w2_ref[...], preferred_element_type=jnp.float32) + b2_ref[...]
    v = y + x.astype(jnp.float32)
    o_ref[...] = _masked_layernorm(v, g_ref[...], bln_ref[...],
                                   h_true, eps).astype(o_ref.dtype)


# ----------------------------- wrappers --------------------------------------


def qkv_projection(xp, w_qkv, b_qkv, tm, vmem_limit):
    mp, hp = xp.shape
    n3 = w_qkv.shape[1]
    it = xp.dtype.itemsize
    return pl.pallas_call(
        qkv_linear_kernel,
        out_shape=jax.ShapeDtypeStruct((mp, n3), xp.dtype),
        grid=(mp // tm,),
        in_specs=[
            pl.BlockSpec((tm, hp), lambda i: (i, 0)),
            pl.BlockSpec((hp, n3), lambda i: (0, 0)),   # VMEM-resident weights
            pl.BlockSpec((1, n3), lambda i: (0, 0)),
        ],
        out_specs=pl.BlockSpec((tm, n3), lambda i: (i, 0)),
        compiler_params=pltpu.CompilerParams(
            dimension_semantics=("parallel",),
            vmem_limit_bytes=vmem_limit),
        cost_estimate=pl.CostEstimate(
            flops=2 * mp * hp * n3, transcendentals=0,
            bytes_accessed=(mp * hp + hp * n3 + n3 + mp * n3) * it),
    )(xp, w_qkv, b_qkv)


def mha_attention(qkv3, mask, *, n_heads, head_dim, hp, vmem_limit):
    """qkv3: [B, S, 3*Hp]; mask: [B, S] (1.0 = keep, 0.0 = pad) -> [B, S, Hp]."""
    b, s, _ = qkv3.shape
    mask3 = mask.reshape(b, 1, s).astype(jnp.float32)
    it = qkv3.dtype.itemsize
    kernel = functools.partial(attn_kernel, n_heads=n_heads, head_dim=head_dim,
                               hp=hp, inv_scale=1.0 / math.sqrt(head_dim))
    return pl.pallas_call(
        kernel,
        out_shape=jax.ShapeDtypeStruct((b, s, hp), qkv3.dtype),
        grid=(b,),
        in_specs=[
            pl.BlockSpec((1, s, 3 * hp), lambda i: (i, 0, 0)),
            pl.BlockSpec((1, 1, s), lambda i: (i, 0, 0)),
        ],
        out_specs=pl.BlockSpec((1, s, hp), lambda i: (i, 0, 0)),
        compiler_params=pltpu.CompilerParams(
            dimension_semantics=("parallel",),
            vmem_limit_bytes=vmem_limit),
        cost_estimate=pl.CostEstimate(
            flops=4 * b * n_heads * s * s * head_dim,
            transcendentals=b * n_heads * s * s,
            bytes_accessed=(4 * b * s * hp + b * s) * it),
    )(qkv3, mask3)


def oproj_add_ln(ctx, res, wo, bo, gamma, beta, tm, vmem_limit, h_true, eps=1e-5):
    mp, hp = ctx.shape
    it = ctx.dtype.itemsize
    kernel = functools.partial(oproj_add_ln_kernel, eps=eps, h_true=h_true)
    return pl.pallas_call(
        kernel,
        out_shape=jax.ShapeDtypeStruct((mp, hp), ctx.dtype),
        grid=(mp // tm,),
        in_specs=[
            pl.BlockSpec((tm, hp), lambda i: (i, 0)),
            pl.BlockSpec((tm, hp), lambda i: (i, 0)),
            pl.BlockSpec((hp, hp), lambda i: (0, 0)),   # VMEM-resident weights
            pl.BlockSpec((1, hp), lambda i: (0, 0)),
            pl.BlockSpec((1, hp), lambda i: (0, 0)),
            pl.BlockSpec((1, hp), lambda i: (0, 0)),
        ],
        out_specs=pl.BlockSpec((tm, hp), lambda i: (i, 0)),
        compiler_params=pltpu.CompilerParams(
            dimension_semantics=("parallel",),
            vmem_limit_bytes=vmem_limit),
        cost_estimate=pl.CostEstimate(
            flops=2 * mp * hp * hp + 10 * mp * hp,
            transcendentals=mp,
            bytes_accessed=(3 * mp * hp + hp * hp + 4 * hp) * it),
    )(ctx, res, wo, bo, gamma, beta)


def ffn_add_ln(x, w1, b1, w2, b2, gamma, beta, tm, vmem_limit, h_true, eps=1e-5):
    mp, hp = x.shape
    pp = w1.shape[1]
    it = x.dtype.itemsize
    # TODO(synk): if hid_dim*pf_dim outgrows the VMEM budget, tile pf_dim with
    # an 'arbitrary' reduction axis + f32 accumulator instead of shrinking tm.
    kernel = functools.partial(ffn_add_ln_kernel, eps=eps, h_true=h_true)
    return pl.pallas_call(
        kernel,
        out_shape=jax.ShapeDtypeStruct((mp, hp), x.dtype),
        grid=(mp // tm,),
        in_specs=[
            pl.BlockSpec((tm, hp), lambda i: (i, 0)),
            pl.BlockSpec((hp, pp), lambda i: (0, 0)),   # VMEM-resident weights
            pl.BlockSpec((1, pp), lambda i: (0, 0)),
            pl.BlockSpec((pp, hp), lambda i: (0, 0)),   # VMEM-resident weights
            pl.BlockSpec((1, hp), lambda i: (0, 0)),
            pl.BlockSpec((1, hp), lambda i: (0, 0)),
            pl.BlockSpec((1, hp), lambda i: (0, 0)),
        ],
        out_specs=pl.BlockSpec((tm, hp), lambda i: (i, 0)),
        compiler_params=pltpu.CompilerParams(
            dimension_semantics=("parallel",),
            vmem_limit_bytes=vmem_limit),
        cost_estimate=pl.CostEstimate(
            flops=4 * mp * hp * pp + 10 * mp * hp,
            transcendentals=mp,
            bytes_accessed=(2 * mp * hp + 2 * hp * pp + pp + 4 * hp) * it),
    )(x, w1, b1, w2, b2, gamma, beta)


# ----------------------------- parameter prep & forward ----------------------


def prepare_encoder_params(p, hid_dim, pf_dim, dtype=jnp.float32):
    """One-time prep: fuse Q/K/V weights and pad all feature dims to 128."""
    hp = _round_up(hid_dim, _LANE)
    pp = _round_up(pf_dim, _LANE)

    def padw(w, r, c):
        return _pad2d(w.astype(dtype), r, c)

    def padb(v, n):
        return jnp.pad(v.astype(dtype), (0, n - v.shape[0])).reshape(1, n)

    w_qkv = jnp.concatenate(
        [padw(p["wq"], hp, hp), padw(p["wk"], hp, hp), padw(p["wv"], hp, hp)],
        axis=1)
    b_qkv = jnp.concatenate(
        [padb(p["bq"], hp), padb(p["bk"], hp), padb(p["bv"], hp)], axis=1)
    return dict(
        n_heads=p["n_heads"], hid_dim=hid_dim, pf_dim=pf_dim, hp=hp, pp=pp,
        w_qkv=w_qkv, b_qkv=b_qkv,
        wo=padw(p["wo"], hp, hp), bo=padb(p["bo"], hp),
        w1=padw(p["w1"], hp, pp), b1=padb(p["b1"], pp),
        w2=padw(p["w2"], pp, hp), b2=padb(p["b2"], hp),
        ln1_g=padb(p["ln1_g"], hp), ln1_b=padb(p["ln1_b"], hp),
        ln2_g=padb(p["ln2_g"], hp), ln2_b=padb(p["ln2_b"], hp),
    )


def encoder_layer_forward(src, src_mask, prep):
    """Eval-mode forward of the PyTorch EncoderLayer (dropout == identity)."""
    b, s, h = src.shape
    nh, hd = prep["n_heads"], h // prep["n_heads"]
    hp, pp = prep["hp"], prep["pp"]
    m = b * s
    it = src.dtype.itemsize
    vmem_limit, budget = _vmem_limits()

    # One row tile for all row-tiled kernels; working sets count 2x for every
    # pipelined block (double buffering) plus in-kernel f32 intermediates.
    tm = min(
        _choose_tm(m, 2 * (hp + 3 * hp) * it + 3 * hp * 4,
                   2 * (hp * 3 * hp + 3 * hp) * it, budget),
        _choose_tm(m, 2 * 3 * hp * it + 2 * hp * 4,
                   2 * (hp * hp + 4 * hp) * it, budget),
        _choose_tm(m, 2 * 2 * hp * it + pp * it + (pp + 2 * hp) * 4,
                   2 * (2 * hp * pp + pp + 4 * hp) * it, budget),
    )
    mp = _round_up(m, tm)

    x2d = src.reshape(m, h)
    xp = _pad2d(x2d, mp, hp)                       # residual, padded

    # --- self attention ------------------------------------------------------
    qkv = qkv_projection(xp, prep["w_qkv"], prep["b_qkv"], tm, vmem_limit)
    qkv3 = qkv[:m].reshape(b, s, 3 * hp)           # free reshape when mp == m

    ctx3 = mha_attention(qkv3, src_mask, n_heads=nh, head_dim=hd, hp=hp,
                         vmem_limit=vmem_limit)
    ctx = ctx3.reshape(m, hp)                      # already in [B*S, Hp] layout
    if mp != m:
        ctx = jnp.pad(ctx, ((0, mp - m), (0, 0)))

    # o-projection + residual + LayerNorm1, fused
    x1 = oproj_add_ln(ctx, xp, prep["wo"], prep["bo"],
                      prep["ln1_g"], prep["ln1_b"], tm, vmem_limit, h)

    # --- positionwise feed-forward + residual + LayerNorm2, fused -------------
    x2 = ffn_add_ln(x1, prep["w1"], prep["b1"], prep["w2"], prep["b2"],
                    prep["ln2_g"], prep["ln2_b"], tm, vmem_limit, h)

    return x2[:m, :h].reshape(b, s, h)


# ----------------------------- reference -------------------------------------


def encoder_layer_reference(src, mask, params):
    hi = jax.lax.Precision.HIGHEST
    mm = functools.partial(jnp.matmul, precision=hi)
    b, s, h = src.shape
    nh = params["n_heads"]
    hd = h // nh

    q = mm(src, params["wq"]) + params["bq"]
    k = mm(src, params["wk"]) + params["bk"]
    v = mm(src, params["wv"]) + params["bv"]

    def heads(t):
        return t.reshape(b, s, nh, hd).transpose(0, 2, 1, 3)

    qh, kh, vh = heads(q), heads(k), heads(v)
    energy = mm(qh, kh.transpose(0, 1, 3, 2)) / math.sqrt(hd)
    energy = jnp.where(mask[:, None, None, :] == 0.0, -1e10, energy)
    attn = jax.nn.softmax(energy, axis=-1)
    ctx = mm(attn, vh).transpose(0, 2, 1, 3).reshape(b, s, h)
    attn_out = mm(ctx, params["wo"]) + params["bo"]

    def layernorm(x, g, bb):
        mu = jnp.mean(x, axis=-1, keepdims=True)
        var = jnp.mean((x - mu) ** 2, axis=-1, keepdims=True)
        return (x - mu) * jax.lax.rsqrt(var + 1e-5) * g + bb

    x = layernorm(src + attn_out, params["ln1_g"], params["ln1_b"])
    ff = jnp.maximum(mm(x, params["w1"]) + params["b1"], 0.0)
    ff = mm(ff, params["w2"]) + params["b2"]
    return layernorm(x + ff, params["ln2_g"], params["ln2_b"])


if __name__ == "__main__":
    batch, seq, hid_dim, n_heads, pf_dim = 2, 8, 32, 4, 64
    key = jax.random.PRNGKey(0)
    k_src, *k_p = jax.random.split(key, 8)

    def init_linear(kk, fan_in, fan_out):
        kw, kb = jax.random.split(kk)
        bound = 1.0 / math.sqrt(fan_in)
        w = jax.random.uniform(kw, (fan_in, fan_out), jnp.float32, -bound, bound)
        bb = jax.random.uniform(kb, (fan_out,), jnp.float32, -bound, bound)
        return w, bb

    wq, bq = init_linear(k_p[0], hid_dim, hid_dim)
    wk, bk = init_linear(k_p[1], hid_dim, hid_dim)
    wv, bv = init_linear(k_p[2], hid_dim, hid_dim)
    wo, bo = init_linear(k_p[3], hid_dim, hid_dim)
    w1, b1 = init_linear(k_p[4], hid_dim, pf_dim)
    w2, b2 = init_linear(k_p[5], pf_dim, hid_dim)

    params = dict(
        n_heads=n_heads,
        wq=wq, bq=bq, wk=wk, bk=bk, wv=wv, bv=bv, wo=wo, bo=bo,
        w1=w1, b1=b1, w2=w2, b2=b2,
        ln1_g=jnp.ones((hid_dim,), jnp.float32),
        ln1_b=jnp.zeros((hid_dim,), jnp.float32),
        ln2_g=jnp.ones((hid_dim,), jnp.float32),
        ln2_b=jnp.zeros((hid_dim,), jnp.float32),
    )

    src = jax.random.normal(k_src, (batch, seq, hid_dim), dtype=jnp.float32)
    # Key-padding mask: batch 0 fully valid, batch 1 has its last 2 keys padded.
    src_mask = jnp.array([[1.0] * seq,
                          [1.0] * (seq - 2) + [0.0] * 2], dtype=jnp.float32)

    prep = prepare_encoder_params(params, hid_dim, pf_dim)
    out = encoder_layer_forward(src, src_mask, prep)
    out = jax.block_until_ready(out)

    ref = encoder_layer_reference(src, src_mask, params)
    assert out.shape == (batch, seq, hid_dim)
    # tolerance loosened slightly for the approx (EUP) softmax reciprocal
    assert jnp.allclose(out, ref, atol=3e-3, rtol=3e-3), float(
        jnp.max(jnp.abs(out - ref)))

    print("KERNEL_OK")
</pallas_src>

<mosaic_0001>
module attributes {stable_mosaic.version = 11 : i64} {
  func.func @qkv_linear_kernel(%arg0: i32, %arg1: memref<16x128xf32, #tpu.memory_space<vmem>>, %arg2: memref<128x384xf32, #tpu.memory_space<vmem>>, %arg3: memref<1x384xf32, #tpu.memory_space<vmem>>, %arg4: memref<16x384xf32, #tpu.memory_space<vmem>>) attributes {dimension_semantics = [#tpu.dimension_semantics<parallel>], iteration_bounds = array<i64: 1>, scalar_prefetch = 0 : i64, scratch_operands = 0 : i64, tpu.core_type = #tpu.core_type<tc>, window_params = [{transform_indices = @transform_0, window_bounds = array<i64: 16, 128>}, {pipeline_mode = #tpu.pipeline_mode<synchronous>, transform_indices = @transform_1, window_bounds = array<i64: 128, 384>}, {pipeline_mode = #tpu.pipeline_mode<synchronous>, transform_indices = @transform_2, window_bounds = array<i64: 1, 384>}, {transform_indices = @transform_3, window_bounds = array<i64: 16, 384>}]} {
    %c0 = arith.constant 0 : index
    %c0_0 = arith.constant 0 : index
    %0 = vector.load %arg1[%c0, %c0_0] : memref<16x128xf32, #tpu.memory_space<vmem>>, vector<16x128xf32>
    %c0_1 = arith.constant 0 : index
    %c0_2 = arith.constant 0 : index
    %1 = vector.load %arg2[%c0_1, %c0_2] : memref<128x384xf32, #tpu.memory_space<vmem>>, vector<128x384xf32>
    %cst = arith.constant dense<0.000000e+00> : vector<16x384xf32>
    %2 = tpu.matmul %0, %1, %cst {dimension_numbers = #tpu.dot_dimension_numbers<[1], [0], [0], [1], [0, 0, 1, 1], [], []>} : vector<16x128xf32>, vector<128x384xf32>, vector<16x384xf32> -> vector<16x384xf32>
    %c0_3 = arith.constant 0 : index
    %c0_4 = arith.constant 0 : index
    %3 = vector.load %arg3[%c0_3, %c0_4] : memref<1x384xf32, #tpu.memory_space<vmem>>, vector<1x384xf32>
    %4 = vector.broadcast %3 : vector<1x384xf32> to vector<16x384xf32>
    %5 = arith.addf %2, %4 : vector<16x384xf32>
    %c0_5 = arith.constant 0 : index
    %c0_6 = arith.constant 0 : index
    %6 = vector.load %arg4[%c0_5, %c0_6] : memref<16x384xf32, #tpu.memory_space<vmem>>, vector<16x384xf32>
    tpu.vector_store %arg4[%c0_5, %c0_6], %5 {strides = array<i32>} : memref<16x384xf32, #tpu.memory_space<vmem>>, vector<16x384xf32>,
    return
  }
  func.func @transform_0(%arg0: i32) -> (i32, i32) {
    %c0_i32 = arith.constant 0 : i32
    %c0_i32_0 = arith.constant 0 : i32
    return %arg0, %c0_i32 : i32, i32
  }
  func.func @transform_1(%arg0: i32) -> (i32, i32) {
    %c0_i32 = arith.constant 0 : i32
    %c0_i32_0 = arith.constant 0 : i32
    %c0_i32_1 = arith.constant 0 : i32
    return %c0_i32, %c0_i32_0 : i32, i32
  }
  func.func @transform_2(%arg0: i32) -> (i32, i32) {
    %c0_i32 = arith.constant 0 : i32
    %c0_i32_0 = arith.constant 0 : i32
    %c0_i32_1 = arith.constant 0 : i32
    return %c0_i32, %c0_i32_0 : i32, i32
  }
  func.func @transform_3(%arg0: i32) -> (i32, i32) {
    %c0_i32 = arith.constant 0 : i32
    %c0_i32_0 = arith.constant 0 : i32
    return %arg0, %c0_i32 : i32, i32
  }
}

</mosaic_0001>

<llo_original>
// kernel: tpu_custom_call.1
$region0: #{tpu_custom_call.1}
  #allocation0 [shape = 'u32[]', space=smem, size = 0x4, offset = 0x4, fixed_abs, tag = 'smem constant byte address 0x4 - core index']
  #allocation1 [shape = 'u32[144,128]{1,0:T(1,128)}', space=vmem, size = 0x12000, scoped, tag = 'internal scratch']
  %s0 = inlined_call_operand.hbm [shape: f32[16,128], index: 0, kind: input, shape index: {}]
  %s1 = inlined_call_operand.hbm [shape: f32[128,384], index: 1, kind: input, shape index: {}]
  %s2 = inlined_call_operand.vmem [shape: f32[1,384], index: 2, kind: input, shape index: {}]
  %s3 = inlined_call_operand.hbm [shape: f32[16,384], index: 3, kind: output, shape index: {}]
  %s4 = sld [smem:[#allocation0]]
  $region30: #{tpu_custom_call.1} parent=0
    _
  %s6 = ssub.s32 1, %s4
  %s7 = scalar_select 0, %s6, %s4
  $region1: #{tpu_custom_call.1} parent=0
    #allocation2 [shape = 'u8[8192]{0}', space=vmem, size = 0x2000, scoped, tag = 'input window, operand 0, single buffered']
    #allocation3 [shape = 's32[1]{0}', space=sflag, size = 0x4, scoped, tag = 'scoped memory for tpu_custom_call.1']
    #allocation4 [shape = 's32[1]{0}', space=sflag, size = 0x4, scoped, tag = 'scoped memory for tpu_custom_call.1']
    #allocation5 [shape = 'u8[196608]{0}', space=vmem, size = 0x30000, scoped, tag = 'input window, operand 1, single buffered']
    #allocation6 [shape = 's32[1]{0}', space=sflag, size = 0x4, scoped, tag = 'scoped memory for tpu_custom_call.1']
    #allocation7 [shape = 'u8[24576]{0}', space=vmem, size = 0x6000, scoped, tag = 'output window, operand 0, single buffered']
    %8 = vsyncpa [#allocation3], 0
    %9 = vsyncpa [#allocation6], 0
    %10 = vsyncpa [#allocation4], 0
    // Predicated region
    $region2: #{tpu_custom_call.1} parent=1 // pred_check
      _
    $region3: #{tpu_custom_call.1} parent=1 // pred_check_branch
      %12 = sbr.rel (0) target = $region5
    $region4: #{tpu_custom_call.1} parent=1 // pred_region
      %s14 = ssub.s32 256, 256
      %15 = vsyncadd [#allocation3], %s14
      %s16 = sshll.u32 [#allocation2], 4
      %s17 = int_to_ptr.vmem [resolvable:$true] %s16
      %22 = dma.hbm_to_vmem [thread:$0]  %s0, 256, %s17, [#allocation3], 128, 128, 8
    $region5: #{tpu_custom_call.1} parent=1 // pred_fallthru
      _
    // Predicated region
    $region6: #{tpu_custom_call.1} parent=1 // pred_check
      _
    $region7: #{tpu_custom_call.1} parent=1 // pred_check_branch
      %24 = sbr.rel (0) target = $region9
    $region8: #{tpu_custom_call.1} parent=1 // pred_region
      %s26 = ssub.s32 6144, 6144
      %27 = vsyncadd [#allocation6], %s26
      %s28 = sshll.u32 [#allocation5], 4
      %s29 = int_to_ptr.vmem [resolvable:$true] %s28
      %34 = dma.hbm_to_vmem [thread:$0]  %s1, 6144, %s29, [#allocation6], 384, 384, 24
    $region9: #{tpu_custom_call.1} parent=1 // pred_fallthru
      _
    // Predicated region
    $region10: #{tpu_custom_call.1} parent=1 // pred_check
      _
    $region11: #{tpu_custom_call.1} parent=1 // pred_check_branch
      %36 = sbr.rel (0) target = $region13
    $region12: #{tpu_custom_call.1} parent=1 // pred_region
      _
    $region13: #{tpu_custom_call.1} parent=1 // pred_fallthru
      _
    // Predicated region
    $region14: #{tpu_custom_call.1} parent=1 // pred_check
      _
    $region15: #{tpu_custom_call.1} parent=1 // pred_check_branch
      %38 = sbr.rel (0) target = $region17
    $region16: #{tpu_custom_call.1} parent=1 // pred_region
      %39 = dma.done [#allocation3], 256
    $region17: #{tpu_custom_call.1} parent=1 // pred_fallthru
      _
    // Predicated region
    $region18: #{tpu_custom_call.1} parent=1 // pred_check
      _
    $region19: #{tpu_custom_call.1} parent=1 // pred_check_branch
      %41 = sbr.rel (0) target = $region21
    $region20: #{tpu_custom_call.1} parent=1 // pred_region
      %42 = dma.done [#allocation6], 6144
    $region21: #{tpu_custom_call.1} parent=1 // pred_fallthru
      _
    %v43 = vld [vmem:[#allocation2] sm:$0xff]
    %v44 = vld [vmem:[#allocation2 + $0x8] sm:$0xff]
    %v45 = vld [vmem:[#allocation5] sm:$0xff]
    %v46 = vld [vmem:[#allocation5 + $0x8] sm:$0xff]
    %v47 = vld [vmem:[#allocation5 + $0x10] sm:$0xff]
    %v48 = vld [vmem:[#allocation5 + $0x18] sm:$0xff]
    %v49 = vld [vmem:[#allocation5 + $0x20] sm:$0xff]
    %v50 = vld [vmem:[#allocation5 + $0x28] sm:$0xff]
    %v51 = vld [vmem:[#allocation5 + $0x30] sm:$0xff]
    %v52 = vld [vmem:[#allocation5 + $0x38] sm:$0xff]
    %v53 = vld [vmem:[#allocation5 + $0x40] sm:$0xff]
    %v54 = vld [vmem:[#allocation5 + $0x48] sm:$0xff]
    %v55 = vld [vmem:[#allocation5 + $0x50] sm:$0xff]
    %v56 = vld [vmem:[#allocation5 + $0x58] sm:$0xff]
    %v57 = vld [vmem:[#allocation5 + $0x60] sm:$0xff]
    %v58 = vld [vmem:[#allocation5 + $0x68] sm:$0xff]
    %v59 = vld [vmem:[#allocation5 + $0x70] sm:$0xff]
    %v60 = vld [vmem:[#allocation5 + $0x78] sm:$0xff]
    %v61 = vld [vmem:[#allocation5 + $0x80] sm:$0xff]
    %v62 = vld [vmem:[#allocation5 + $0x88] sm:$0xff]
    %v63 = vld [vmem:[#allocation5 + $0x90] sm:$0xff]
    %v64 = vld [vmem:[#allocation5 + $0x98] sm:$0xff]
    %v65 = vld [vmem:[#allocation5 + $0xa0] sm:$0xff]
    %v66 = vld [vmem:[#allocation5 + $0xa8] sm:$0xff]
    %v67 = vld [vmem:[#allocation5 + $0xb0] sm:$0xff]
    %v68 = vld [vmem:[#allocation5 + $0xb8] sm:$0xff]
    %v69 = vld [vmem:[#allocation5 + $0xc0] sm:$0xff]
    %v70 = vld [vmem:[#allocation5 + $0xc8] sm:$0xff]
    %v71 = vld [vmem:[#allocation5 + $0xd0] sm:$0xff]
    %v72 = vld [vmem:[#allocation5 + $0xd8] sm:$0xff]
    %v73 = vld [vmem:[#allocation5 + $0xe0] sm:$0xff]
    %v74 = vld [vmem:[#allocation5 + $0xe8] sm:$0xff]
    %v75 = vld [vmem:[#allocation5 + $0xf0] sm:$0xff]
    %v76 = vld [vmem:[#allocation5 + $0xf8] sm:$0xff]
    %v77 = vld [vmem:[#allocation5 + $0x100] sm:$0xff]
    %v78 = vld [vmem:[#allocation5 + $0x108] sm:$0xff]
    %v79 = vld [vmem:[#allocation5 + $0x110] sm:$0xff]
    %v80 = vld [vmem:[#allocation5 + $0x118] sm:$0xff]
    %v81 = vld [vmem:[#allocation5 + $0x120] sm:$0xff]
    %v82 = vld [vmem:[#allocation5 + $0x128] sm:$0xff]
    %v83 = vld [vmem:[#allocation5 + $0x130] sm:$0xff]
    %v84 = vld [vmem:[#allocation5 + $0x138] sm:$0xff]
    %v85 = vld [vmem:[#allocation5 + $0x140] sm:$0xff]
    %v86 = vld [vmem:[#allocation5 + $0x148] sm:$0xff]
    %v87 = vld [vmem:[#allocation5 + $0x150] sm:$0xff]
    %v88 = vld [vmem:[#allocation5 + $0x158] sm:$0xff]
    %v89 = vld [vmem:[#allocation5 + $0x160] sm:$0xff]
    %v90 = vld [vmem:[#allocation5 + $0x168] sm:$0xff]
    %v91 = vld [vmem:[#allocation5 + $0x170] sm:$0xff]
    %v92 = vld [vmem:[#allocation5 + $0x178] sm:$0xff]
    %v93 = vld [vmem:[%s2] sm:$0x7]
    %v95 = vlaneseq
    %v96 = vshrl.u32 %v95, 7
    %v97 = vsub.s32 0, %v96
    %v98 = vrot.slane %v93, %v97
    %v99 = vlaneseq
    %v100 = vshrl.u32 %v99, 7
    %v101 = vsub.s32 1, %v100
    %v102 = vrot.slane %v93, %v101
    %v103 = vlaneseq
    %v104 = vshrl.u32 %v103, 7
    %v105 = vsub.s32 2, %v104
    %v106 = vrot.slane %v93, %v105
    %110 = vmatprep.subr.mxu0 %v46
    %111 = vmatpush1.msra.mxu0 %v45
    %112 = vmatprep.subr.mxu0 %v49
    %113 = vmatpush1.msra.mxu0 %v48
    %114 = vmatprep.subr.mxu0 %v52
    %115 = vmatpush1.msra.mxu0 %v51
    %116 = vmatprep.subr.mxu0 %v55
    %117 = vmatpush1.msra.mxu0 %v54
    %118 = vmatprep.subr.mxu0 %v58
    %119 = vmatpush1.msra.mxu0 %v57
    %120 = vmatprep.subr.mxu0 %v61
    %121 = vmatpush1.msra.mxu0 %v60
    %122 = vmatprep.subr.mxu0 %v64
    %123 = vmatpush1.msra.mxu0 %v63
    %124 = vmatprep.subr.mxu0 %v67
    %125 = vmatpush1.msra.mxu0 %v66
    %126 = vmatprep.subr.mxu0 %v70
    %127 = vmatpush1.msra.mxu0 %v69
    %128 = vmatprep.subr.mxu0 %v73
    %129 = vmatpush1.msra.mxu0 %v72
    %130 = vmatprep.subr.mxu0 %v76
    %131 = vmatpush1.msra.mxu0 %v75
    %132 = vmatprep.subr.mxu0 %v79
    %133 = vmatpush1.msra.mxu0 %v78
    %134 = vmatprep.subr.mxu0 %v82
    %135 = vmatpush1.msra.mxu0 %v81
    %136 = vmatprep.subr.mxu0 %v85
    %137 = vmatpush1.msra.mxu0 %v84
    %138 = vmatprep.subr.mxu0 %v88
    %139 = vmatpush1.msra.mxu0 %v87
    %140 = vmatprep.subr.mxu0 %v91
    %141 = vmatpush1.msra.mxu0 %v90
    %142 = vmatprep.subr.mxu0 0.0
    %143 = vmatpush1.msra.mxu0 0.0
    %144 = vmatprep.subr.mxu0 0.0
    %145 = vmatpush1.msra.mxu0 0.0
    %146 = vmatprep.subr.mxu0 0.0
    %147 = vmatpush1.msra.mxu0 0.0
    %148 = vmatprep.subr.mxu0 0.0
    %149 = vmatpush1.msra.mxu0 0.0
    %150 = vmatprep.subr.mxu0 0.0
    %151 = vmatpush1.msra.mxu0 0.0
    %152 = vmatprep.subr.mxu0 0.0
    %153 = vmatpush1.msra.mxu0 0.0
    %154 = vmatprep.subr.mxu0 0.0
    %155 = vmatpush1.msra.mxu0 0.0
    %156 = vmatprep.subr.mxu0 0.0
    %157 = vmatpush1.msra.mxu0 0.0
    %158 = vmatprep.subr.mxu0 0.0
    %159 = vmatpush1.msra.mxu0 0.0
    %160 = vmatprep.subr.mxu0 0.0
    %161 = vmatpush1.msra.mxu0 0.0
    %162 = vmatprep.subr.mxu0 0.0
    %163 = vmatpush1.msra.mxu0 0.0
    %164 = vmatprep.subr.mxu0 0.0
    %165 = vmatpush1.msra.mxu0 0.0
    %166 = vmatprep.subr.mxu0 0.0
    %167 = vmatpush1.msra.mxu0 0.0
    %168 = vmatprep.subr.mxu0 0.0
    %169 = vmatpush1.msra.mxu0 0.0
    %170 = vmatprep.subr.mxu0 0.0
    %171 = vmatpush1.msra.mxu0 0.0
    %172 = vmatprep.subr.mxu0 0.0
    %173 = vmatpush1.msra.mxu0 0.0
    %174 = vmatprep.mubr.f32.mxu0 0.0
    %175 = vmatmul.mubr.f32.gmra.mrb[0].mxu0 %v43
    %v176 = vpop.f32.mrb[0].mxu0
    %v177 = vadd.f32 %v98, %v176
    %v178 = vpop.f32.mrb[0].mxu0
    %v179 = vadd.f32 %v102, %v178
    %180 = vmatprep.mubr.f32.mxu0 0.0
    %181 = vmatmul.mubr.f32.gmra.mrb[0].mxu0 %v44
    %v182 = vpop.f32.mrb[0].mxu0
    %v183 = vadd.f32 %v98, %v182
    %v184 = vpop.f32.mrb[0].mxu0
    %v185 = vadd.f32 %v102, %v184
    %186 = vdwg.mxu0
    %187 = vmatprep.subr.mxu0 0.0
    %188 = vmatpush1.msra.mxu0 %v47
    %189 = vmatprep.subr.mxu0 0.0
    %190 = vmatpush1.msra.mxu0 %v50
    %191 = vmatprep.subr.mxu0 0.0
    %192 = vmatpush1.msra.mxu0 %v53
    %193 = vmatprep.subr.mxu0 0.0
    %194 = vmatpush1.msra.mxu0 %v56
    %195 = vmatprep.subr.mxu0 0.0
    %196 = vmatpush1.msra.mxu0 %v59
    %197 = vmatprep.subr.mxu0 0.0
    %198 = vmatpush1.msra.mxu0 %v62
    %199 = vmatprep.subr.mxu0 0.0
    %200 = vmatpush1.msra.mxu0 %v65
    %201 = vmatprep.subr.mxu0 0.0
    %202 = vmatpush1.msra.mxu0 %v68
    %203 = vmatprep.subr.mxu0 0.0
    %204 = vmatpush1.msra.mxu0 %v71
    %205 = vmatprep.subr.mxu0 0.0
    %206 = vmatpush1.msra.mxu0 %v74
    %207 = vmatprep.subr.mxu0 0.0
    %208 = vmatpush1.msra.mxu0 %v77
    %209 = vmatprep.subr.mxu0 0.0
    %210 = vmatpush1.msra.mxu0 %v80
    %211 = vmatprep.subr.mxu0 0.0
    %212 = vmatpush1.msra.mxu0 %v83
    %213 = vmatprep.subr.mxu0 0.0
    %214 = vmatpush1.msra.mxu0 %v86
    %215 = vmatprep.subr.mxu0 0.0
    %216 = vmatpush1.msra.mxu0 %v89
    %217 = vmatprep.subr.mxu0 0.0
    %218 = vmatpush1.msra.mxu0 %v92
    %219 = vmatprep.subr.mxu0 0.0
    %220 = vmatpush1.msra.mxu0 0.0
    %221 = vmatprep.subr.mxu0 0.0
    %222 = vmatpush1.msra.mxu0 0.0
    %223 = vmatprep.subr.mxu0 0.0
    %224 = vmatpush1.msra.mxu0 0.0
    %225 = vmatprep.subr.mxu0 0.0
    %226 = vmatpush1.msra.mxu0 0.0
    %227 = vmatprep.subr.mxu0 0.0
    %228 = vmatpush1.msra.mxu0 0.0
    %229 = vmatprep.subr.mxu0 0.0
    %230 = vmatpush1.msra.mxu0 0.0
    %231 = vmatprep.subr.mxu0 0.0
    %232 = vmatpush1.msra.mxu0 0.0
    %233 = vmatprep.subr.mxu0 0.0
    %234 = vmatpush1.msra.mxu0 0.0
    %235 = vmatprep.subr.mxu0 0.0
    %236 = vmatpush1.msra.mxu0 0.0
    %237 = vmatprep.subr.mxu0 0.0
    %238 = vmatpush1.msra.mxu0 0.0
    %239 = vmatprep.subr.mxu0 0.0
    %240 = vmatpush1.msra.mxu0 0.0
    %241 = vmatprep.subr.mxu0 0.0
    %242 = vmatpush1.msra.mxu0 0.0
    %243 = vmatprep.subr.mxu0 0.0
    %244 = vmatpush1.msra.mxu0 0.0
    %245 = vmatprep.subr.mxu0 0.0
    %246 = vmatpush1.msra.mxu0 0.0
    %247 = vmatprep.subr.mxu0 0.0
    %248 = vmatpush1.msra.mxu0 0.0
    %249 = vmatprep.subr.mxu0 0.0
    %250 = vmatpush1.msra.mxu0 0.0
    %251 = vmatprep.mubr.f32.mxu0 0.0
    %252 = vmatmul.mubr.f32.gmra.mrb[0].mxu0 %v43
    %v253 = vpop.f32.mrb[0].mxu0
    %v254 = vadd.f32 %v106, %v253
    %v255 = vpop.f32.mrb[0].mxu0
    %256 = vmatprep.mubr.f32.mxu0 0.0
    %257 = vmatmul.mubr.f32.gmra.mrb[0].mxu0 %v44
    %v258 = vpop.f32.mrb[0].mxu0
    %v259 = vadd.f32 %v106, %v258
    %v260 = vpop.f32.mrb[0].mxu0
    %261 = vdwg.mxu0
    %262 = vst [vmem:[#allocation7] sm:$0xff] %v177
    %263 = vst [vmem:[#allocation7 + $0x8] sm:$0xff] %v179
    %264 = vst [vmem:[#allocation7 + $0x10] sm:$0xff] %v254
    %265 = vst [vmem:[#allocation7 + $0x18] sm:$0xff] %v183
    %266 = vst [vmem:[#allocation7 + $0x20] sm:$0xff] %v185
    %267 = vst [vmem:[#allocation7 + $0x28] sm:$0xff] %v259
    // Predicated region
    $region22: #{tpu_custom_call.1} parent=1 // pred_check
      _
    $region23: #{tpu_custom_call.1} parent=1 // pred_check_branch
      %269 = sbr.rel (0) target = $region25
    $region24: #{tpu_custom_call.1} parent=1 // pred_region
      %s271 = ssub.s32 768, 768
      %272 = vsyncadd [#allocation4], %s271
      %s273 = sshll.u32 [#allocation7], 4
      %s274 = int_to_ptr.vmem [resolvable:$true] %s273
      %279 = dma.vmem_to_hbm [thread:$0]  %s274, 768, %s3, [#allocation4], 384, 384, 24
    $region25: #{tpu_custom_call.1} parent=1 // pred_fallthru
      _
    // Predicated region
    $region26: #{tpu_custom_call.1} parent=1 // pred_check
      _
    $region27: #{tpu_custom_call.1} parent=1 // pred_check_branch
      %281 = sbr.rel (0) target = $region29
    $region28: #{tpu_custom_call.1} parent=1 // pred_region
      %282 = dma.done [#allocation4], 768
    $region29: #{tpu_custom_call.1} parent=1 // pred_fallthru
      _
    %283 = vsyncpa [#allocation3], 1
    %284 = vsyncpa [#allocation6], 1
    %285 = vsyncpa [#allocation4], 1

</llo_original>
